<compile_context>
chip_gen: v6e
topology: v6e:2x2x1
jax: 0.10.0
libtpu: 0.0.40
codegen_flags: <defaults>
</compile_context>

<pallas_src>
import math

import jax
import jax.numpy as jnp
from jax.experimental import pallas as pl
from jax.experimental.pallas import tpu as pltpu

EPS = 1e-5
MM_DTYPE = jnp.bfloat16            # MXU input dtype (accumulation stays f32)
VMEM_LIMIT = 32 * 1024 * 1024      # explicit scoped-VMEM budget (fits v7x 64 MiB)


# ------------------------------ helpers -------------------------------------

def _pick_tile(total, target, prefer_split=False):
    """Largest divisor of `total` that is a multiple of 8 and <= target.

    With prefer_split=True, avoid a single-step grid when a smaller
    multiple-of-8 divisor exists (keeps both v7x TensorCores busy).
    """
    divs = [d for d in range(1, total + 1) if total % d == 0]
    ok = [d for d in divs if d <= target and d % 8 == 0]
    tile = max(ok) if ok else total
    if prefer_split and tile == total:
        smaller = [d for d in divs if d % 8 == 0 and d < total]
        if smaller:
            tile = max(smaller)
    return tile


def _cparams(n_parallel_dims):
    return pltpu.CompilerParams(
        dimension_semantics=("parallel",) * n_parallel_dims,
        vmem_limit_bytes=VMEM_LIMIT)


def bn_scale_shift(p):
    # Inference-mode BN folded to a single scale/shift per channel.
    scale = p["gamma"] * jax.lax.rsqrt(p["var"] + EPS)
    shift = p["beta"] - p["mean"] * scale
    return scale, shift


def im2col(x_nhwc, ksize, stride):
    """Padded (same) im2col with stride; returns (N*Ho*Wo, k*k*C) patches."""
    n, h, w, c = x_nhwc.shape
    pad = (ksize - 1) // 2
    xp = jnp.pad(x_nhwc, ((0, 0), (pad, pad), (pad, pad), (0, 0)))
    ho = (h + 2 * pad - ksize) // stride + 1
    wo = (w + 2 * pad - ksize) // stride + 1
    cols = []
    for kh in range(ksize):
        for kw in range(ksize):
            cols.append(xp[:, kh:kh + stride * (ho - 1) + 1:stride,
                              kw:kw + stride * (wo - 1) + 1:stride, :])
    patches = jnp.concatenate(cols, axis=-1).reshape(n * ho * wo, ksize * ksize * c)
    return patches, ho, wo


# ------------------------------ kernels -------------------------------------

def bn_relu_kernel(x_ref, s_ref, b_ref, o_ref):
    # x: (tile, L) f32 ; s/b: (1, L) f32 ; o: (tile, L) (bf16 store)
    y = jnp.maximum(x_ref[...] * s_ref[...] + b_ref[...], 0.0)
    o_ref[...] = y.astype(o_ref.dtype)


def matmul_bn_relu_kernel(a_ref, w_ref, s_ref, b_ref, o_ref):
    # conv1 (im2col matmul) fused with BN2 + ReLU epilogue.
    acc = jnp.dot(a_ref[...], w_ref[...], preferred_element_type=jnp.float32)
    y = jnp.maximum(acc * s_ref[...] + b_ref[...], 0.0)
    o_ref[...] = y.astype(o_ref.dtype)


def matmul_add_kernel(a_ref, w_ref, sc_ref, o_ref):
    # conv2 (im2col matmul) fused with identity-shortcut residual add.
    acc = jnp.dot(a_ref[...], w_ref[...], preferred_element_type=jnp.float32)
    o_ref[...] = (acc + sc_ref[...]).astype(o_ref.dtype)


def matmul_matmul_add_kernel(a_ref, w_ref, sc_ref, wsc_ref, o_ref):
    # conv2 matmul + 1x1-shortcut matmul + residual add, all fused.
    acc = jnp.dot(a_ref[...], w_ref[...], preferred_element_type=jnp.float32)
    acc = acc + jnp.dot(sc_ref[...], wsc_ref[...],
                        preferred_element_type=jnp.float32)
    o_ref[...] = acc.astype(o_ref.dtype)


# ------------------------------ wrappers ------------------------------------

def bn_relu(x_nhwc, scale, shift, out_dtype):
    n, h, w, c = x_nhwc.shape
    total = n * h * w * c
    # Lane-dense view: flatten to (rows, 128) whenever the channel pattern
    # repeats cleanly across a 128-wide row; params are tiled to (1, 128).
    if total % 128 == 0 and 128 % c == 0:
        lanes = 128
    else:
        lanes = c  # fallback (not hit in the tests): lane-sparse but valid
    rows = total // lanes
    xf = x_nhwc.reshape(rows, lanes)
    reps = lanes // c
    s = jnp.tile(scale.astype(jnp.float32), reps).reshape(1, lanes)
    b = jnp.tile(shift.astype(jnp.float32), reps).reshape(1, lanes)

    tile_r = _pick_tile(rows, 256, prefer_split=True)
    row_spec = pl.BlockSpec((tile_r, lanes), lambda i: (i, 0))
    prm_spec = pl.BlockSpec((1, lanes), lambda i: (0, 0))
    out = pl.pallas_call(
        bn_relu_kernel,
        out_shape=jax.ShapeDtypeStruct((rows, lanes), out_dtype),
        grid=(rows // tile_r,),
        in_specs=[row_spec, prm_spec, prm_spec],
        out_specs=row_spec,
        compiler_params=_cparams(1),
    )(xf, s, b)
    return out.reshape(n, h, w, c)


def conv1_bn_relu(patches, w_flat, scale, shift, out_dtype):
    m, k = patches.shape
    cout = w_flat.shape[1]
    tile_m = _pick_tile(m, 256, prefer_split=True)
    return pl.pallas_call(
        matmul_bn_relu_kernel,
        out_shape=jax.ShapeDtypeStruct((m, cout), out_dtype),
        grid=(m // tile_m,),
        in_specs=[pl.BlockSpec((tile_m, k), lambda i: (i, 0)),
                  pl.BlockSpec((k, cout), lambda i: (0, 0)),
                  pl.BlockSpec((1, cout), lambda i: (0, 0)),
                  pl.BlockSpec((1, cout), lambda i: (0, 0))],
        out_specs=pl.BlockSpec((tile_m, cout), lambda i: (i, 0)),
        compiler_params=_cparams(1),
    )(patches, w_flat,
      scale.reshape(1, cout).astype(jnp.float32),
      shift.reshape(1, cout).astype(jnp.float32))


def conv2_add_identity(patches, w_flat, shortcut):
    m, k = patches.shape
    cout = w_flat.shape[1]
    tile_m = _pick_tile(m, 256, prefer_split=True)
    return pl.pallas_call(
        matmul_add_kernel,
        out_shape=jax.ShapeDtypeStruct((m, cout), jnp.float32),
        grid=(m // tile_m,),
        in_specs=[pl.BlockSpec((tile_m, k), lambda i: (i, 0)),
                  pl.BlockSpec((k, cout), lambda i: (0, 0)),
                  pl.BlockSpec((tile_m, cout), lambda i: (i, 0))],
        out_specs=pl.BlockSpec((tile_m, cout), lambda i: (i, 0)),
        compiler_params=_cparams(1),
    )(patches, w_flat, shortcut)


def conv2_add_conv_shortcut(patches, w_flat, sc_in, w_sc):
    m, k = patches.shape
    cout = w_flat.shape[1]
    cin = w_sc.shape[0]
    tile_m = _pick_tile(m, 256, prefer_split=True)
    return pl.pallas_call(
        matmul_matmul_add_kernel,
        out_shape=jax.ShapeDtypeStruct((m, cout), jnp.float32),
        grid=(m // tile_m,),
        in_specs=[pl.BlockSpec((tile_m, k), lambda i: (i, 0)),
                  pl.BlockSpec((k, cout), lambda i: (0, 0)),
                  pl.BlockSpec((tile_m, cin), lambda i: (i, 0)),
                  pl.BlockSpec((cin, cout), lambda i: (0, 0))],
        out_specs=pl.BlockSpec((tile_m, cout), lambda i: (i, 0)),
        compiler_params=_cparams(1),
    )(patches, w_flat, sc_in, w_sc)


# --------------------------- BasicBlock (Pallas) ----------------------------

def init_basic_block(key, in_planes, out_planes):
    ks = jax.random.split(key, 5)

    def bn_params(k, c):
        k1, k2, k3, k4 = jax.random.split(k, 4)
        return dict(gamma=jax.random.uniform(k1, (c,), jnp.float32, 0.5, 1.5),
                    beta=jax.random.normal(k2, (c,), jnp.float32) * 0.1,
                    mean=jax.random.normal(k3, (c,), jnp.float32) * 0.1,
                    var=jax.random.uniform(k4, (c,), jnp.float32, 0.5, 1.5))

    params = dict(
        bn1=bn_params(ks[0], in_planes),
        w1=jax.random.normal(ks[1], (3, 3, in_planes, out_planes), jnp.float32)
        * (1.0 / math.sqrt(9 * in_planes)),
        bn2=bn_params(ks[2], out_planes),
        w2=jax.random.normal(ks[3], (3, 3, out_planes, out_planes), jnp.float32)
        * (1.0 / math.sqrt(9 * out_planes)),
    )
    if in_planes != out_planes:
        params["w_sc"] = (jax.random.normal(
            ks[4], (1, 1, in_planes, out_planes), jnp.float32)
            * (1.0 / math.sqrt(in_planes)))
    return params


def basic_block_forward(params, x_nchw, in_planes, out_planes, stride, drop_rate):
    equal_inout = in_planes == out_planes
    x = jnp.transpose(x_nchw, (0, 2, 3, 1)).astype(jnp.float32)   # NCHW -> NHWC
    n = x.shape[0]

    # BN1 + ReLU (lane-dense); stored in bf16 for the MXU path.
    s1, b1 = bn_scale_shift(params["bn1"])
    h = bn_relu(x, s1, b1, MM_DTYPE)

    # conv1 with stride computed directly via strided im2col, fused BN2+ReLU.
    patches1, ho, wo = im2col(h, 3, stride)                        # (M, 9*Cin) bf16
    m = n * ho * wo
    s2, b2 = bn_scale_shift(params["bn2"])
    w1f = params["w1"].reshape(9 * in_planes, out_planes).astype(MM_DTYPE)
    out1 = conv1_bn_relu(patches1, w1f, s2, b2, MM_DTYPE)          # (M, Cout) bf16

    # TODO(synk): F.dropout with drop_rate>0 in training mode not implemented;
    # eval-mode dropout (and drop_rate=0) is the identity, as used here.
    del drop_rate

    # conv2 fused with the residual add (and 1x1 shortcut conv when needed).
    patches2, _, _ = im2col(out1.reshape(n, ho, wo, out_planes), 3, 1)
    w2f = params["w2"].reshape(9 * out_planes, out_planes).astype(MM_DTYPE)

    if equal_inout:
        sc = x[:, ::stride, ::stride, :].reshape(m, out_planes)    # identity (f32)
        out = conv2_add_identity(patches2, w2f, sc)
    else:
        hs = h[:, ::stride, ::stride, :].reshape(m, in_planes)     # bf16
        wsc = params["w_sc"].reshape(in_planes, out_planes).astype(MM_DTYPE)
        out = conv2_add_conv_shortcut(patches2, w2f, hs, wsc)

    out = out.reshape(n, ho, wo, out_planes)
    return jnp.transpose(out, (0, 3, 1, 2))                        # NHWC -> NCHW


# ------------------------------ references ----------------------------------

def ref_forward(params, x_nchw, in_planes, out_planes, stride, mm_dtype):
    x = jnp.transpose(x_nchw, (0, 2, 3, 1)).astype(jnp.float32)

    def bnr(v, p):
        s, b = bn_scale_shift(p)
        return jnp.maximum(v * s + b, 0.0)

    def conv(v, w, s, pad):
        return jax.lax.conv_general_dilated(
            v.astype(mm_dtype), w.astype(mm_dtype), (s, s), pad,
            dimension_numbers=("NHWC", "HWIO", "NHWC"),
            preferred_element_type=jnp.float32)

    equal_inout = in_planes == out_planes
    h = bnr(x, params["bn1"])
    out = conv(h, params["w1"], stride, ((1, 1), (1, 1)))
    out = bnr(out, params["bn2"])
    out = conv(out, params["w2"], 1, ((1, 1), (1, 1)))
    sc = x if equal_inout else conv(h, params["w_sc"], stride, ((0, 0), (0, 0)))
    return jnp.transpose(sc + out, (0, 3, 1, 2))


# -------------------------------- main ---------------------------------------

if __name__ == "__main__":
    key = jax.random.PRNGKey(0)
    configs = [
        dict(in_planes=4, out_planes=8, stride=2),   # projection shortcut
        dict(in_planes=8, out_planes=8, stride=1),   # identity shortcut
    ]
    for idx, cfg in enumerate(configs):
        kx, kp = jax.random.split(jax.random.fold_in(key, idx))
        ip, op, st = cfg["in_planes"], cfg["out_planes"], cfg["stride"]
        x = jax.random.normal(kx, (2, ip, 16, 16), jnp.float32)   # NCHW (PyTorch)
        params = init_basic_block(kp, ip, op)

        out = basic_block_forward(params, x, ip, op, st, drop_rate=0.0)
        out = jax.block_until_ready(out)
        assert out.shape == (2, op, 16 // st, 16 // st), out.shape

        # Matched-precision reference (bf16 MXU inputs, f32 accumulation).
        ref_bf16 = ref_forward(params, x, ip, op, st, mm_dtype=MM_DTYPE)
        assert jnp.allclose(out, ref_bf16, atol=1e-2, rtol=1e-2), \
            float(jnp.max(jnp.abs(out - ref_bf16)))

        # Loose check vs full-f32 reference (bounds bf16 quantization error).
        ref_f32 = ref_forward(params, x, ip, op, st, mm_dtype=jnp.float32)
        assert jnp.allclose(out, ref_f32, atol=1e-1, rtol=1e-1), \
            float(jnp.max(jnp.abs(out - ref_f32)))

    print("KERNEL_OK")
</pallas_src>

<mosaic_0001>
module attributes {stable_mosaic.version = 11 : i64} {
  func.func @bn_relu_kernel(%arg0: i32, %arg1: memref<8x128xf32, #tpu.memory_space<vmem>>, %arg2: memref<1x128xf32, #tpu.memory_space<vmem>>, %arg3: memref<1x128xf32, #tpu.memory_space<vmem>>, %arg4: memref<8x128xbf16, #tpu.memory_space<vmem>>) attributes {dimension_semantics = [#tpu.dimension_semantics<parallel>], iteration_bounds = array<i64: 2>, scalar_prefetch = 0 : i64, scratch_operands = 0 : i64, tpu.core_type = #tpu.core_type<tc>, window_params = [{transform_indices = @transform_0, window_bounds = array<i64: 8, 128>}, {pipeline_mode = #tpu.pipeline_mode<synchronous>, transform_indices = @transform_1, window_bounds = array<i64: 1, 128>}, {pipeline_mode = #tpu.pipeline_mode<synchronous>, transform_indices = @transform_2, window_bounds = array<i64: 1, 128>}, {transform_indices = @transform_3, window_bounds = array<i64: 8, 128>}]} {
    %c0 = arith.constant 0 : index
    %c0_0 = arith.constant 0 : index
    %0 = vector.load %arg1[%c0, %c0_0] : memref<8x128xf32, #tpu.memory_space<vmem>>, vector<8x128xf32>
    %c0_1 = arith.constant 0 : index
    %c0_2 = arith.constant 0 : index
    %1 = vector.load %arg2[%c0_1, %c0_2] : memref<1x128xf32, #tpu.memory_space<vmem>>, vector<1x128xf32>
    %2 = vector.broadcast %1 : vector<1x128xf32> to vector<8x128xf32>
    %3 = arith.mulf %0, %2 : vector<8x128xf32>
    %c0_3 = arith.constant 0 : index
    %c0_4 = arith.constant 0 : index
    %4 = vector.load %arg3[%c0_3, %c0_4] : memref<1x128xf32, #tpu.memory_space<vmem>>, vector<1x128xf32>
    %5 = vector.broadcast %4 : vector<1x128xf32> to vector<8x128xf32>
    %6 = arith.addf %3, %5 : vector<8x128xf32>
    %cst = arith.constant 0.000000e+00 : f32
    %7 = vector.broadcast %cst : f32 to vector<8x128xf32>
    %8 = arith.maximumf %6, %7 : vector<8x128xf32>
    %9 = arith.truncf %8 : vector<8x128xf32> to vector<8x128xbf16>
    %c0_5 = arith.constant 0 : index
    %c0_6 = arith.constant 0 : index
    %10 = vector.load %arg4[%c0_5, %c0_6] : memref<8x128xbf16, #tpu.memory_space<vmem>>, vector<8x128xbf16>
    tpu.vector_store %arg4[%c0_5, %c0_6], %9 {strides = array<i32>} : memref<8x128xbf16, #tpu.memory_space<vmem>>, vector<8x128xbf16>,
    return
  }
  func.func @transform_0(%arg0: i32) -> (i32, i32) {
    %c0_i32 = arith.constant 0 : i32
    %c0_i32_0 = arith.constant 0 : i32
    return %arg0, %c0_i32 : i32, i32
  }
  func.func @transform_1(%arg0: i32) -> (i32, i32) {
    %c0_i32 = arith.constant 0 : i32
    %c0_i32_0 = arith.constant 0 : i32
    %c0_i32_1 = arith.constant 0 : i32
    return %c0_i32, %c0_i32_0 : i32, i32
  }
  func.func @transform_2(%arg0: i32) -> (i32, i32) {
    %c0_i32 = arith.constant 0 : i32
    %c0_i32_0 = arith.constant 0 : i32
    %c0_i32_1 = arith.constant 0 : i32
    return %c0_i32, %c0_i32_0 : i32, i32
  }
  func.func @transform_3(%arg0: i32) -> (i32, i32) {
    %c0_i32 = arith.constant 0 : i32
    %c0_i32_0 = arith.constant 0 : i32
    return %arg0, %c0_i32 : i32, i32
  }
}

</mosaic_0001>

<llo_original>
// kernel: tpu_custom_call.1
$region0: #{tpu_custom_call.1}
  #allocation0 [shape = 'u32[]', space=smem, size = 0x4, offset = 0x4, fixed_abs, tag = 'smem constant byte address 0x4 - core index']
  #allocation1 [shape = 'u32[144,128]{1,0:T(1,128)}', space=vmem, size = 0x12000, scoped, tag = 'internal scratch']
  %s0 = inlined_call_operand.hbm [shape: f32[16,128], index: 0, kind: input, shape index: {}]
  %s1 = inlined_call_operand.vmem [shape: f32[1,128], index: 1, kind: input, shape index: {}]
  %s2 = inlined_call_operand.vmem [shape: f32[1,128], index: 2, kind: input, shape index: {}]
  %s3 = inlined_call_operand.hbm [shape: bf16[16,128], index: 3, kind: output, shape index: {}]
  %s4 = sld [smem:[#allocation0]]
  $region49: #{tpu_custom_call.1} parent=0
    _
  %s6 = ssub.s32 1, %s4
  %s7 = scalar_select 0, %s6, %s4
  $region1: #{tpu_custom_call.1} parent=0
    #allocation2 [shape = 'u8[8192]{0}', space=vmem, size = 0x2000, scoped, tag = 'input window, operand 0']
    #allocation3 [shape = 's32[2]{0}', space=sflag, size = 0x8, scoped, tag = 'scoped memory for tpu_custom_call.1']
    #allocation4 [shape = 's32[2]{0}', space=sflag, size = 0x8, scoped, tag = 'scoped memory for tpu_custom_call.1']
    #allocation5 [shape = 'u8[4096]{0}', space=vmem, size = 0x1000, scoped, tag = 'output window, operand 0']
    %8 = vsyncpa [#allocation3], 0
    %s9 = scalar_lea.sflag [#allocation3], 1
    %10 = vsyncpa %s9, 0
    %11 = vsyncpa [#allocation4], 0
    %s12 = scalar_lea.sflag [#allocation4], 1
    %13 = vsyncpa %s12, 0
    loop: start=0, step=1, limit=4
    $region2: #{tpu_custom_call.1} parent=1 // loop_pre_header
      _
    $region3: #{tpu_custom_call.1} parent=1 // loop_header
      %s15 = sphi 0, %s19
      %p16 = scmp.ge.s32.totalorder %s15, 4
      %s25 = sphi 0, %s27
      %s28 = sphi 0, %s25
      %s29 = sphi 0, %s28
      %s45 = sphi 0, %s29
      %s49 = sphi 0, %s49
      %s51 = sphi 0, %s49
      %s52 = sphi 0, %s51
      %s66 = sphi 0, %s52
      %s70 = sphi 0, %s70
      %s72 = sphi 0, %s70
      %s73 = sphi 0, %s72
      %s87 = sphi 0, %s73
      %s93 = sphi 0, %s95
      %s96 = sphi 0, %s93
      %s97 = sphi 0, %s96
      %s113 = sphi 0, %s97
    $region4: #{tpu_custom_call.1} parent=1 // loop_header_branch
      %18 = sbr.rel (%p16) target = $region8
    $region5: #{tpu_custom_call.1} parent=1 // loop_body
      %s20 = ssub.s32 %s15, 1
      %s21 = ssub.s32 %s15, 2
      %s22 = sadd.s32 %s15, 1
      %s23 = ssub.s32 %s15, %s22
      %p24 = scmp.eq.s32.totalorder %s23, 0
      %s26 = sadd.s32 %s25, 1
      %s27 = scalar_select %p24, %s25, %s26
      %p30 = pneg %p24
      %p31 = scmp.eq.s32.totalorder %s15, 1
      %p32 = por %p30, %p31
      %p33 = scmp.ne.s32.totalorder %s25, %s28
      %p34 = scmp.eq.s32.totalorder %s15, 0
      %p35 = por %p33, %p34
      %p36 = scmp.ne.s32.totalorder %s25, %s28
      %p37 = scmp.eq.s32.totalorder %s20, 1
      %p38 = por %p36, %p37
      %p39 = scmp.ne.s32.totalorder %s28, %s29
      %p40 = scmp.eq.s32.totalorder %s20, 0
      %p41 = por %p39, %p40
      %p42 = scmp.ne.s32.totalorder %s28, %s29
      %p43 = scmp.eq.s32.totalorder %s21, 1
      %p44 = por %p42, %p43
      %p46 = scmp.ne.s32.totalorder %s29, %s45
      %p47 = scmp.eq.s32.totalorder %s21, 0
      %p48 = por %p46, %p47
      %s50 = sadd.s32 %s49, 1
      %p53 = scmp.eq.s32.totalorder %s15, 1
      %p54 = scmp.ne.s32.totalorder %s49, %s51
      %p55 = scmp.eq.s32.totalorder %s15, 0
      %p56 = por %p54, %p55
      %p57 = scmp.ne.s32.totalorder %s49, %s51
      %p58 = scmp.eq.s32.totalorder %s20, 1
      %p59 = por %p57, %p58
      %p60 = scmp.ne.s32.totalorder %s51, %s52
      %p61 = scmp.eq.s32.totalorder %s20, 0
      %p62 = por %p60, %p61
      %p63 = scmp.ne.s32.totalorder %s51, %s52
      %p64 = scmp.eq.s32.totalorder %s21, 1
      %p65 = por %p63, %p64
      %p67 = scmp.ne.s32.totalorder %s52, %s66
      %p68 = scmp.eq.s32.totalorder %s21, 0
      %p69 = por %p67, %p68
      %s71 = sadd.s32 %s70, 1
      %p74 = scmp.eq.s32.totalorder %s15, 1
      %p75 = scmp.ne.s32.totalorder %s70, %s72
      %p76 = scmp.eq.s32.totalorder %s15, 0
      %p77 = por %p75, %p76
      %p78 = scmp.ne.s32.totalorder %s70, %s72
      %p79 = scmp.eq.s32.totalorder %s20, 1
      %p80 = por %p78, %p79
      %p81 = scmp.ne.s32.totalorder %s72, %s73
      %p82 = scmp.eq.s32.totalorder %s20, 0
      %p83 = por %p81, %p82
      %p84 = scmp.ne.s32.totalorder %s72, %s73
      %p85 = scmp.eq.s32.totalorder %s21, 1
      %p86 = por %p84, %p85
      %p88 = scmp.ne.s32.totalorder %s73, %s87
      %p89 = scmp.eq.s32.totalorder %s21, 0
      %p90 = por %p88, %p89
      %s91 = ssub.s32 %s15, %s22
      %p92 = scmp.eq.s32.totalorder %s91, 0
      %s94 = sadd.s32 %s93, 1
      %s95 = scalar_select %p92, %s93, %s94
      %p98 = pneg %p92
      %p99 = scmp.eq.s32.totalorder %s15, 1
      %p100 = por %p98, %p99
      %p101 = scmp.ne.s32.totalorder %s93, %s96
      %p102 = scmp.eq.s32.totalorder %s15, 0
      %p103 = por %p101, %p102
      %p104 = scmp.ne.s32.totalorder %s93, %s96
      %p105 = scmp.eq.s32.totalorder %s20, 1
      %p106 = por %p104, %p105
      %p107 = scmp.ne.s32.totalorder %s96, %s97
      %p108 = scmp.eq.s32.totalorder %s20, 0
      %p109 = por %p107, %p108
      %p110 = scmp.ne.s32.totalorder %s96, %s97
      %p111 = scmp.eq.s32.totalorder %s21, 1
      %p112 = por %p110, %p111
      %p114 = scmp.ne.s32.totalorder %s97, %s113
      %p115 = scmp.eq.s32.totalorder %s21, 0
      %p116 = por %p114, %p115
      %p117 = scmp.le.s32.totalorder 1, %s15
      %p118 = scmp.lt.s32.totalorder %s15, 3
      %p119 = pnand %p117, %p118
      %p120 = pneg %p119
      // Predicated region
      $region9: #{tpu_custom_call.1} parent=5 // pred_check
        _
      $region10: #{tpu_custom_call.1} parent=5 // pred_check_branch
        %122 = sbr.rel (%p119) target = $region12
      $region11: #{tpu_custom_call.1} parent=5 // pred_region
        %s123 = ssub.s32 %s15, 1
        // Predicated region
        $region13: #{tpu_custom_call.1} parent=11 // pred_check
          %p124 = pneg %p62
        $region14: #{tpu_custom_call.1} parent=11 // pred_check_branch
          %126 = sbr.rel (%p124) target = $region16
        $region15: #{tpu_custom_call.1} parent=11 // pred_region
          _
        $region16: #{tpu_custom_call.1} parent=11 // pred_fallthru
          _
        // Predicated region
        $region17: #{tpu_custom_call.1} parent=11 // pred_check
          %p127 = pneg %p83
        $region18: #{tpu_custom_call.1} parent=11 // pred_check_branch
          %129 = sbr.rel (%p127) target = $region20
        $region19: #{tpu_custom_call.1} parent=11 // pred_region
          _
        $region20: #{tpu_custom_call.1} parent=11 // pred_fallthru
          _
      $region12: #{tpu_custom_call.1} parent=5 // pred_fallthru
        _
      %p130 = scmp.lt.s32.totalorder %s15, 2
      // Predicated region
      $region21: #{tpu_custom_call.1} parent=5 // pred_check
        %p131 = pneg %p130
      $region22: #{tpu_custom_call.1} parent=5 // pred_check_branch
        %133 = sbr.rel (%p131) target = $region24
      $region23: #{tpu_custom_call.1} parent=5 // pred_region
        // Predicated region
        $region25: #{tpu_custom_call.1} parent=23 // pred_check
          %p134 = pneg %p35
        $region26: #{tpu_custom_call.1} parent=23 // pred_check_branch
          %136 = sbr.rel (%p134) target = $region28
        $region27: #{tpu_custom_call.1} parent=23 // pred_region
          %s137 = sand.u32 %s25, 1
          %s138 = scalar_lea.sflag [#allocation3], %s137
          %s139 = sand.u32 %s25, 1
          %s140 = smul.addr %s139, 8
          %s141 = scalar_lea.vmem [#allocation2], %s140
          %s143 = ssub.s32 128, 128
          %144 = vsyncadd %s138, %s143
          %s145 = smul.addr %s15, 128
          %s146 = scalar_lea.hbm %s0, %s145
          %s148 = sshll.u32 %s141, 4
          %s149 = int_to_ptr.vmem [resolvable:$true] %s148
          %151 = dma.hbm_to_vmem [thread:$0]  %s146, 128, %s149, %s138
        $region28: #{tpu_custom_call.1} parent=23 // pred_fallthru
          _
      $region24: #{tpu_custom_call.1} parent=5 // pred_fallthru
        _
      %p152 = scmp.le.s32.totalorder 1, %s15
      %p153 = scmp.lt.s32.totalorder %s15, 3
      %p154 = pnand %p152, %p153
      %p155 = pneg %p154
      // Predicated region
      $region29: #{tpu_custom_call.1} parent=5 // pred_check
        _
      $region30: #{tpu_custom_call.1} parent=5 // pred_check_branch
        %157 = sbr.rel (%p154) target = $region32
      $region31: #{tpu_custom_call.1} parent=5 // pred_region
        %s158 = ssub.s32 %s15, 1
        %s159 = sand.u32 %s28, 1
        %s160 = scalar_lea.sflag [#allocation3], %s159
        %s161 = sand.u32 %s28, 1
        %s162 = smul.addr %s161, 8
        %s163 = scalar_lea.vmem [#allocation2], %s162
        // Predicated region
        $region33: #{tpu_custom_call.1} parent=31 // pred_check
          %p164 = pneg %p41
        $region34: #{tpu_custom_call.1} parent=31 // pred_check_branch
          %166 = sbr.rel (%p164) target = $region36
        $region35: #{tpu_custom_call.1} parent=31 // pred_region
          %167 = dma.done %s160, 128
        $region36: #{tpu_custom_call.1} parent=31 // pred_fallthru
          _
        %s168 = sand.u32 %s28, 1
        %s169 = scalar_lea.sflag [#allocation3], %s168
        %s170 = sand.u32 %s28, 1
        %s171 = smul.addr %s170, 8
        %s172 = scalar_lea.vmem [#allocation2], %s171
        %p173 = pneg %p41
        %p174 = pneg %p38
        %p175 = pneg %p62
        %p176 = pneg %p59
        %p177 = pneg %p83
        %p178 = pneg %p80
        %p179 = pneg %p109
        %p180 = pneg %p106
        %s181 = sand.u32 %s96, 1
        %s182 = scalar_lea.sflag [#allocation4], %s181
        %s183 = sand.u32 %s96, 1
        %s184 = smul.addr %s183, 4
        %s185 = scalar_lea.vmem [#allocation5], %s184
        %v186 = vld [vmem:[%s163] sm:$0xff]
        %v187 = vld [vmem:[%s1] sm:$0x1]
        %v189 = vlaneseq
        %v190 = vshrl.u32 %v189, 7
        %v191 = vsub.s32 0, %v190
        %v192 = vrot.slane %v187, %v191
        %v194 = vmul.f32 %v186, %v192
        %v195 = vld [vmem:[%s2] sm:$0x1]
        %v197 = vlaneseq
        %v198 = vshrl.u32 %v197, 7
        %v199 = vsub.s32 0, %v198
        %v200 = vrot.slane %v195, %v199
        %v202 = vadd.f32 %v194, %v200
        %v203 = vmax.f32 %v202, 0.0
        %v204 = vpack.c.bf16 %v203, %v203
        %205 = vst [vmem:[%s185] sm:$0xf] %v204
        %s206 = sand.u32 %s96, 1
        %s207 = scalar_lea.sflag [#allocation4], %s206
        %s208 = sand.u32 %s96, 1
        %s209 = smul.addr %s208, 4
        %s210 = scalar_lea.vmem [#allocation5], %s209
        // Predicated region
        $region37: #{tpu_custom_call.1} parent=31 // pred_check
          %p211 = pneg %p106
        $region38: #{tpu_custom_call.1} parent=31 // pred_check_branch
          %213 = sbr.rel (%p211) target = $region40
        $region39: #{tpu_custom_call.1} parent=31 // pred_region
          %s215 = ssub.s32 64, 64
          %216 = vsyncadd %s207, %s215
          %s217 = smul.addr %s20, 64
          %s218 = scalar_lea.hbm %s3, %s217
          %s220 = sshll.u32 %s210, 4
          %s221 = int_to_ptr.vmem [resolvable:$true] %s220
          %223 = dma.vmem_to_hbm [thread:$0]  %s221, 64, %s218, %s207
        $region40: #{tpu_custom_call.1} parent=31 // pred_fallthru
          _
      $region32: #{tpu_custom_call.1} parent=5 // pred_fallthru
        _
      %p224 = scmp.le.s32.totalorder 2, %s15
      // Predicated region
      $region41: #{tpu_custom_call.1} parent=5 // pred_check
        %p225 = pneg %p224
      $region42: #{tpu_custom_call.1} parent=5 // pred_check_branch
        %227 = sbr.rel (%p225) target = $region44
      $region43: #{tpu_custom_call.1} parent=5 // pred_region
        %s228 = ssub.s32 %s15, 2
        // Predicated region
        $region45: #{tpu_custom_call.1} parent=43 // pred_check
          %p229 = pneg %p112
        $region46: #{tpu_custom_call.1} parent=43 // pred_check_branch
          %231 = sbr.rel (%p229) target = $region48
        $region47: #{tpu_custom_call.1} parent=43 // pred_region
          %s232 = sand.u32 %s97, 1
          %s233 = scalar_lea.sflag [#allocation4], %s232
          %s234 = sand.u32 %s97, 1
          %s235 = smul.addr %s234, 4
          %s236 = scalar_lea.vmem [#allocation5], %s235
          %237 = dma.done %s233, 64
        $region48: #{tpu_custom_call.1} parent=43 // pred_fallthru
          _
      $region44: #{tpu_custom_call.1} parent=5 // pred_fallthru
        _
    $region6: #{tpu_custom_call.1} parent=1 // loop_footer
      %s19 = sadd.s32 1, %s15
    $region7: #{tpu_custom_call.1} parent=1 // loop_footer_branch
      %14 = sbr.rel target = $region3
    $region8: #{tpu_custom_call.1} parent=1 // loop_exit
      _
    %238 = vsyncpa [#allocation3], 1
    %s239 = scalar_lea.sflag [#allocation3], 1
    %240 = vsyncpa %s239, 1
    %241 = vsyncpa [#allocation4], 1
    %s242 = scalar_lea.sflag [#allocation4], 1
    %243 = vsyncpa %s242, 1

</llo_original>
